<compile_context>
chip_gen: v7x
topology: tpu7x:2x2x1
jax: 0.10.0
libtpu: 0.0.40
codegen_flags: <defaults>
</compile_context>

<pallas_src>
import functools

import jax
import jax.numpy as jnp
from jax import lax
from jax.experimental import pallas as pl
from jax.experimental.pallas import tpu as pltpu

LN_EPS = 1e-5  # PyTorch nn.LayerNorm default


def _round_up(x, m):
    return ((x + m - 1) // m) * m


# ---------------------------------------------------------------------------
# Hardware queries (all best-effort, with safe fallbacks)
# ---------------------------------------------------------------------------
def _vmem_capacity_bytes():
    try:
        info = pltpu.get_tpu_info()
        for name in ("vmem_capacity_bytes", "vmem_bytes", "vmem_size_bytes"):
            v = getattr(info, name, None)
            if isinstance(v, int) and v > 0:
                return int(v)
    except Exception:
        pass
    return 64 << 20  # conservative default (v7x per-TC VMEM)


def _tensorcores_per_chip():
    try:
        info = pltpu.get_tpu_info()
        for name in ("num_cores", "tensorcores_per_chip", "cores_per_chip",
                     "num_tensorcores", "core_count"):
            v = getattr(info, name, None)
            if isinstance(v, int) and v > 0:
                return int(v)
    except Exception:
        pass
    try:
        if "7" in jax.devices()[0].device_kind.lower():
            return 2
    except Exception:
        pass
    return 1


def _default_ln_tail_bf16():
    """bf16 LayerNorm-affine/ReLU tail only where the VPU has bf16 ALUs."""
    try:
        kind = jax.devices()[0].device_kind.lower()
        for tag in ("v2", "v3", "v4", "v5"):
            if tag in kind:
                return False
        return True
    except Exception:
        return False


def _probe_kernel(a_ref, o_ref):
    o_ref[...] = a_ref[...] + 1.0


@functools.lru_cache(maxsize=None)
def _single_buffer_supported():
    """Feature-detect pipeline_mode=pl.Buffered(1) with one tiny eager compile
    so the decision never surfaces as a deferred jit compile failure."""
    try:
        x = jnp.zeros((8, 128), jnp.float32)
        fn = pl.pallas_call(
            _probe_kernel,
            out_shape=jax.ShapeDtypeStruct((16, 128), jnp.float32),
            grid=(2,),
            in_specs=[pl.BlockSpec((8, 128), lambda i: (0, 0),
                                   pipeline_mode=pl.Buffered(1))],
            out_specs=pl.BlockSpec((8, 128), lambda i: (i, 0)),
        )
        jax.block_until_ready(fn(x))
        return True
    except Exception:
        return False


# ---------------------------------------------------------------------------
# Kernel
# ---------------------------------------------------------------------------
def _mlp_kernel(hidden_layers, hidden_true, hidden_pad, ln_tail_bf16, *refs):
    """Fused [Linear -> LayerNorm -> ReLU] * L -> Linear on one row tile.

    Weights are bf16 (MXU-native, f32 accumulation). Hidden width is padded
    to a 128-lane multiple; padded weight columns / bias / gamma / beta lanes
    are zero, so post-linear padded lanes are exactly 0 and LayerNorm stats
    are corrected with a scalar term (no per-layer lane mask)."""
    x_ref = refs[0]
    w_refs = refs[1:1 + hidden_layers]
    pos = 1 + hidden_layers
    vecs_ref = None
    if hidden_layers > 0:
        vecs_ref = refs[pos]          # (3*L, hidden_pad) f32: b / gamma / beta
        pos += 1
    w_out_ref = refs[pos]
    b_out_ref = refs[pos + 1]
    out_ref = refs[pos + 2]

    h = x_ref[...]
    inv_h = 1.0 / float(hidden_true) if hidden_true > 0 else 1.0
    pad_count = float(hidden_pad - hidden_true)

    for l in range(hidden_layers):
        w = w_refs[l][...]                               # (k, hidden_pad) bf16
        b = vecs_ref[pl.ds(3 * l + 0, 1), :]             # (1, hidden_pad) f32
        g = vecs_ref[pl.ds(3 * l + 1, 1), :]
        beta = vecs_ref[pl.ds(3 * l + 2, 1), :]

        # Linear: bf16 in, f32 accumulate (MXU). Padded output lanes are 0.
        h = jnp.dot(h.astype(w.dtype), w,
                    preferred_element_type=jnp.float32) + b

        # LayerNorm over the TRUE hidden width. Padded lanes of h are 0, so
        # diff there equals -mean; correct the sum-of-squares algebraically
        # instead of masking (no per-layer iota/select chain).
        mean = jnp.sum(h, axis=-1, keepdims=True) * inv_h
        diff = h - mean
        ssq = jnp.sum(diff * diff, axis=-1, keepdims=True)
        if pad_count > 0.0:
            ssq = ssq - pad_count * (mean * mean)
        x_hat = diff * lax.rsqrt(ssq * inv_h + LN_EPS)   # rsqrt -> EUP

        if ln_tail_bf16:
            # bf16 affine + ReLU (bf16 VALU, 2x elems/vreg); feeds next MXU
            # matmul directly. Padded gamma/beta lanes are 0 -> h stays 0.
            h = jnp.maximum(
                x_hat.astype(jnp.bfloat16) * g.astype(jnp.bfloat16)
                + beta.astype(jnp.bfloat16),
                jnp.asarray(0, jnp.bfloat16))
        else:
            h = jnp.maximum(x_hat * g + beta, 0.0)

    w_out = w_out_ref[...]                               # (k, out_dim) bf16
    y = jnp.dot(h.astype(w_out.dtype), w_out,
                preferred_element_type=jnp.float32) + b_out_ref[...]
    out_ref[...] = y.astype(out_ref.dtype)


# ---------------------------------------------------------------------------
# Wrapper
# ---------------------------------------------------------------------------
def _choose_tile_b(n, requested, num_cores):
    if n <= 8:
        return max(int(n), 1)
    max_tile = (n // 8) * 8                   # largest 8-multiple <= n
    tile = min(_round_up(max(int(requested), 8), 8), max_tile)
    # Multi-TC chips (v7x): guarantee >=2 grid steps for small n so both
    # TensorCores get work; single-TC chips keep one step (no per-step
    # pipeline overhead for zero parallelism gain).
    if num_cores >= 2 and n >= 16 and pl.cdiv(n, tile) < num_cores:
        tile = min(tile, _round_up(pl.cdiv(n, num_cores), 8))
    return tile


def dense_categorical_decoder_forward(features, params, *, num_channels,
                                      num_classes, hidden_layers,
                                      tile_b=None, weight_dtype=jnp.bfloat16,
                                      out_dtype=jnp.float32,
                                      ln_tail_bf16=None):
    """features: (..., in_dim). Returns logits of shape (-1, C, K).

    out_dtype=jnp.bfloat16 halves logit writeback (worthwhile on v5e/v7x) if
    the downstream categorical loss tolerates bf16 logits."""
    in_dim = features.shape[-1]
    x = features.reshape(-1, in_dim)            # flatten_batch
    n = x.shape[0]
    out_dim = num_channels * num_classes
    out_itemsize = jnp.dtype(out_dtype).itemsize

    if ln_tail_bf16 is None:
        ln_tail_bf16 = _default_ln_tail_bf16()

    hidden_dim = params["hidden"][0][0].shape[1] if params["hidden"] else in_dim
    hidden_pad = _round_up(hidden_dim, 128)     # lane-aligned intermediates

    # --- flatten + pad params ----------------------------------------------
    # Weights -> bf16 (MXU-native, halves DMA); per-layer bias/gamma/beta are
    # packed into a single stacked f32 array. Padded rows/cols/lanes are 0.
    weights = []
    vec_rows = []
    prev_pad = in_dim                            # first-layer K stays unpadded
    for (w, b, g, beta) in params["hidden"]:
        weights.append(jnp.pad(w.astype(weight_dtype),
                               ((0, prev_pad - w.shape[0]),
                                (0, hidden_pad - w.shape[1]))))
        vec_rows.append(jnp.pad(b.astype(jnp.float32), (0, hidden_pad - b.shape[0])))
        vec_rows.append(jnp.pad(g.astype(jnp.float32), (0, hidden_pad - g.shape[0])))
        vec_rows.append(jnp.pad(beta.astype(jnp.float32), (0, hidden_pad - beta.shape[0])))
        prev_pad = hidden_pad
    w_out, b_out = params["out"]
    w_out_p = jnp.pad(w_out.astype(weight_dtype),
                      ((0, prev_pad - w_out.shape[0]), (0, 0)))  # cols = out_dim
    b_out_p = b_out.astype(jnp.float32).reshape(1, out_dim)

    operands = [x] + weights
    if hidden_layers > 0:
        operands.append(jnp.stack(vec_rows, axis=0))   # (3*L, hidden_pad) f32
    operands += [w_out_p, b_out_p]
    param_arrays = operands[1:]
    param_bytes = sum(int(p.size) * p.dtype.itemsize for p in param_arrays)

    # --- generation-aware tiling / VMEM budget ------------------------------
    vmem_cap = _vmem_capacity_bytes()            # 128 MiB v5e/v6e, 64 MiB v7x
    vmem_budget_cap = int(0.85 * vmem_cap)       # leave Mosaic scratch headroom
    num_cores = _tensorcores_per_chip()
    single_buf = _single_buffer_supported()
    param_mult = 1 if single_buf else 2

    if tile_b is None:
        tile_b = 128 if (vmem_cap <= (64 << 20) and out_dim >= 4096) else 256

    def _budget(tb):
        io = 2 * tb * in_dim * x.dtype.itemsize + 2 * tb * out_dim * out_itemsize
        act = 6 * tb * max(in_dim, hidden_pad, out_dim) * 4
        return param_mult * param_bytes + io + act + (2 << 20)

    cand = int(tile_b)
    tile_b = _choose_tile_b(n, cand, num_cores)
    while cand > 64 and _budget(tile_b) > vmem_budget_cap:
        cand //= 2
        tile_b = _choose_tile_b(n, cand, num_cores)
    vmem_limit = int(min(max(_budget(tile_b), 16 << 20), vmem_budget_cap))

    # Ragged last tile: OOB reads are harmless, OOB writes are dropped, so no
    # batch padding and no post-kernel slice.
    grid = (pl.cdiv(n, tile_b),)

    def _const_spec(arr):
        idx_map = (lambda i, _z=(0,) * arr.ndim: _z)   # explicit binding
        if single_buf:
            return pl.BlockSpec(arr.shape, idx_map, pipeline_mode=pl.Buffered(1))
        return pl.BlockSpec(arr.shape, idx_map)

    in_specs = ([pl.BlockSpec((tile_b, in_dim), lambda i: (i, 0))]
                + [_const_spec(p) for p in param_arrays])
    out_specs = pl.BlockSpec((tile_b, out_dim), lambda i: (i, 0))

    # Cost hint for XLA scheduling around the custom call.
    gemm_dims = []
    prev = in_dim
    for _ in range(hidden_layers):
        gemm_dims.append((prev, hidden_pad))
        prev = hidden_pad
    gemm_dims.append((prev, out_dim))
    flops = (2 * n * sum(a * b for a, b in gemm_dims)
             + 8 * n * hidden_pad * hidden_layers)
    bytes_accessed = (int(x.size) * x.dtype.itemsize
                      + n * out_dim * out_itemsize + param_bytes)
    cost = pl.CostEstimate(flops=int(flops),
                           transcendentals=int(n * hidden_layers),
                           bytes_accessed=int(bytes_accessed))

    kernel = functools.partial(_mlp_kernel, hidden_layers, hidden_dim,
                               hidden_pad, bool(ln_tail_bf16))

    # TODO(synk): on v7x, verify with xprof that the "parallel" batch axis is
    # sharded across both TensorCores; if not, switch to an explicit
    # CORE_PARALLEL leading axis. fp8 weights (v7x) not adopted here.
    y = pl.pallas_call(
        kernel,
        out_shape=jax.ShapeDtypeStruct((n, out_dim), out_dtype),
        grid=grid,
        in_specs=in_specs,
        out_specs=out_specs,
        compiler_params=pltpu.CompilerParams(
            dimension_semantics=("parallel",),
            vmem_limit_bytes=vmem_limit),
        cost_estimate=cost,
    )(*operands)

    return y.reshape(-1, num_channels, num_classes)


# ---------------------------------------------------------------------------
# Pure-JAX reference (same bf16-weight / bf16-tail quantization as the kernel)
# ---------------------------------------------------------------------------
def _reference_forward(features, params, *, num_channels, num_classes,
                       weight_dtype=jnp.bfloat16, ln_tail_bf16=False):
    x = features.reshape(-1, features.shape[-1]).astype(jnp.float32)
    h = x
    for (w, b, g, beta) in params["hidden"]:
        h = jnp.dot(h.astype(weight_dtype), w.astype(weight_dtype),
                    preferred_element_type=jnp.float32) + b
        mean = jnp.mean(h, axis=-1, keepdims=True)
        var = jnp.mean((h - mean) ** 2, axis=-1, keepdims=True)
        x_hat = (h - mean) * lax.rsqrt(var + LN_EPS)
        if ln_tail_bf16:
            h = jnp.maximum(
                x_hat.astype(jnp.bfloat16) * g.astype(jnp.bfloat16)
                + beta.astype(jnp.bfloat16),
                jnp.asarray(0, jnp.bfloat16)).astype(jnp.float32)
        else:
            h = jnp.maximum(x_hat * g + beta, 0.0)
    w_out, b_out = params["out"]
    y = jnp.dot(h.astype(weight_dtype), w_out.astype(weight_dtype),
                preferred_element_type=jnp.float32) + b_out
    return y.reshape(-1, num_channels, num_classes)


def init_params(key, in_dim, hidden_dim, hidden_layers, out_dim):
    """Deterministic synthetic parameter init (not a checkpoint load)."""
    params = {"hidden": [], "out": None}
    d = in_dim
    for _ in range(hidden_layers):
        key, kw, kb = jax.random.split(key, 3)
        w = jax.random.normal(kw, (d, hidden_dim), jnp.float32) * (1.0 / jnp.sqrt(d))
        b = jax.random.normal(kb, (hidden_dim,), jnp.float32) * 0.01
        gamma = jnp.ones((hidden_dim,), jnp.float32)
        beta = jnp.zeros((hidden_dim,), jnp.float32)
        params["hidden"].append((w, b, gamma, beta))
        d = hidden_dim
    key, kw, kb = jax.random.split(key, 3)
    w_out = jax.random.normal(kw, (d, out_dim), jnp.float32) * (1.0 / jnp.sqrt(d))
    b_out = jax.random.normal(kb, (out_dim,), jnp.float32) * 0.01
    params["out"] = (w_out, b_out)
    return params


if __name__ == "__main__":
    # Small shapes consistent with the module's forward pass.
    batch = 16
    in_dim = 32
    num_channels = 4
    num_classes = 8
    hidden_dim = 32
    hidden_layers = 2
    out_dim = num_channels * num_classes

    key = jax.random.PRNGKey(0)
    key, kf = jax.random.split(key)
    features = jax.random.normal(kf, (batch, in_dim), jnp.float32)
    params = init_params(key, in_dim, hidden_dim, hidden_layers, out_dim)

    ln_tail = _default_ln_tail_bf16()

    fwd = jax.jit(functools.partial(
        dense_categorical_decoder_forward,
        num_channels=num_channels, num_classes=num_classes,
        hidden_layers=hidden_layers, ln_tail_bf16=ln_tail))
    y = jax.block_until_ready(fwd(features, params))

    y_ref = _reference_forward(features, params,
                               num_channels=num_channels,
                               num_classes=num_classes,
                               ln_tail_bf16=ln_tail)

    assert y.shape == (batch, num_channels, num_classes), y.shape
    max_err = float(jnp.max(jnp.abs(y - y_ref)))
    assert jnp.allclose(y, y_ref, atol=3e-3, rtol=3e-3), max_err

    # TODO(synk): nn.CrossEntropyLoss (.loss() / set_criterion_weights) is not
    # part of forward(); not implemented as a kernel here.
    print("KERNEL_OK")
</pallas_src>

<mosaic_0001>
module attributes {stable_mosaic.version = 11 : i64} {
  func.func @_mlp_kernel(%arg0: i32, %arg1: memref<16x32xf32, #tpu.memory_space<vmem>>, %arg2: memref<32x128xbf16, #tpu.memory_space<vmem>>, %arg3: memref<128x128xbf16, #tpu.memory_space<vmem>>, %arg4: memref<6x128xf32, #tpu.memory_space<vmem>>, %arg5: memref<128x32xbf16, #tpu.memory_space<vmem>>, %arg6: memref<1x32xf32, #tpu.memory_space<vmem>>, %arg7: memref<16x32xf32, #tpu.memory_space<vmem>>) attributes {dimension_semantics = [#tpu.dimension_semantics<parallel>], iteration_bounds = array<i64: 1>, scalar_prefetch = 0 : i64, scratch_operands = 0 : i64, tpu.core_type = #tpu.core_type<tc>, window_params = [{transform_indices = @transform_0, window_bounds = array<i64: 16, 32>}, {pipeline_mode = #tpu.pipeline_mode<synchronous>, transform_indices = @transform_1, window_bounds = array<i64: 32, 128>}, {pipeline_mode = #tpu.pipeline_mode<synchronous>, transform_indices = @transform_2, window_bounds = array<i64: 128, 128>}, {pipeline_mode = #tpu.pipeline_mode<synchronous>, transform_indices = @transform_3, window_bounds = array<i64: 6, 128>}, {pipeline_mode = #tpu.pipeline_mode<synchronous>, transform_indices = @transform_4, window_bounds = array<i64: 128, 32>}, {pipeline_mode = #tpu.pipeline_mode<synchronous>, transform_indices = @transform_5, window_bounds = array<i64: 1, 32>}, {transform_indices = @transform_6, window_bounds = array<i64: 16, 32>}]} {
    %c0 = arith.constant 0 : index
    %c0_0 = arith.constant 0 : index
    %0 = vector.load %arg1[%c0, %c0_0] : memref<16x32xf32, #tpu.memory_space<vmem>>, vector<16x32xf32>
    %c0_1 = arith.constant 0 : index
    %c0_2 = arith.constant 0 : index
    %1 = vector.load %arg2[%c0_1, %c0_2] : memref<32x128xbf16, #tpu.memory_space<vmem>>, vector<32x128xbf16>
    %c0_3 = arith.constant 0 : index
    %c0_4 = arith.constant 0 : index
    %2 = vector.load %arg4[%c0_3, %c0_4] : memref<6x128xf32, #tpu.memory_space<vmem>>, vector<1x128xf32>
    %c1 = arith.constant 1 : index
    %c0_5 = arith.constant 0 : index
    %3 = vector.load %arg4[%c1, %c0_5] : memref<6x128xf32, #tpu.memory_space<vmem>>, vector<1x128xf32>
    %c2 = arith.constant 2 : index
    %c0_6 = arith.constant 0 : index
    %4 = vector.load %arg4[%c2, %c0_6] : memref<6x128xf32, #tpu.memory_space<vmem>>, vector<1x128xf32>
    %5 = arith.truncf %0 : vector<16x32xf32> to vector<16x32xbf16>
    %cst = arith.constant dense<0.000000e+00> : vector<16x128xf32>
    %6 = tpu.matmul %5, %1, %cst {dimension_numbers = #tpu.dot_dimension_numbers<[1], [0], [0], [1], [0, 0, 1, 1], [], []>} : vector<16x32xbf16>, vector<32x128xbf16>, vector<16x128xf32> -> vector<16x128xf32>
    %7 = vector.broadcast %2 : vector<1x128xf32> to vector<16x128xf32>
    %8 = arith.addf %6, %7 : vector<16x128xf32>
    %cst_7 = arith.constant dense<0.000000e+00> : vector<16xf32>
    %9 = vector.multi_reduction <add>, %8, %cst_7 [1] : vector<16x128xf32> to vector<16xf32>
    %10 = vector.shape_cast %9 : vector<16xf32> to vector<16x1xf32>
    %cst_8 = arith.constant 3.125000e-02 : f32
    %11 = vector.broadcast %cst_8 : f32 to vector<16x1xf32>
    %12 = arith.mulf %10, %11 : vector<16x1xf32>
    %13 = vector.broadcast %12 : vector<16x1xf32> to vector<16x128xf32>
    %14 = arith.subf %8, %13 : vector<16x128xf32>
    %15 = arith.mulf %14, %14 : vector<16x128xf32>
    %cst_9 = arith.constant dense<0.000000e+00> : vector<16xf32>
    %16 = vector.multi_reduction <add>, %15, %cst_9 [1] : vector<16x128xf32> to vector<16xf32>
    %17 = vector.shape_cast %16 : vector<16xf32> to vector<16x1xf32>
    %18 = arith.mulf %12, %12 : vector<16x1xf32>
    %cst_10 = arith.constant 9.600000e+01 : f32
    %19 = vector.broadcast %cst_10 : f32 to vector<16x1xf32>
    %20 = arith.mulf %19, %18 : vector<16x1xf32>
    %21 = arith.subf %17, %20 : vector<16x1xf32>
    %cst_11 = arith.constant 3.125000e-02 : f32
    %22 = vector.broadcast %cst_11 : f32 to vector<16x1xf32>
    %23 = arith.mulf %21, %22 : vector<16x1xf32>
    %cst_12 = arith.constant 9.99999974E-6 : f32
    %24 = vector.broadcast %cst_12 : f32 to vector<16x1xf32>
    %25 = arith.addf %23, %24 : vector<16x1xf32>
    %26 = math.rsqrt %25 : vector<16x1xf32>
    %27 = vector.broadcast %26 : vector<16x1xf32> to vector<16x128xf32>
    %28 = arith.mulf %14, %27 : vector<16x128xf32>
    %29 = arith.truncf %28 : vector<16x128xf32> to vector<16x128xbf16>
    %30 = arith.truncf %3 : vector<1x128xf32> to vector<1x128xbf16>
    %31 = vector.broadcast %30 : vector<1x128xbf16> to vector<16x128xbf16>
    %32 = arith.mulf %29, %31 : vector<16x128xbf16>
    %33 = arith.truncf %4 : vector<1x128xf32> to vector<1x128xbf16>
    %34 = vector.broadcast %33 : vector<1x128xbf16> to vector<16x128xbf16>
    %35 = arith.addf %32, %34 : vector<16x128xbf16>
    %cst_13 = arith.constant 0.000000e+00 : bf16
    %36 = vector.broadcast %cst_13 : bf16 to vector<16x128xbf16>
    %37 = arith.maximumf %35, %36 : vector<16x128xbf16>
    %c0_14 = arith.constant 0 : index
    %c0_15 = arith.constant 0 : index
    %38 = vector.load %arg3[%c0_14, %c0_15] : memref<128x128xbf16, #tpu.memory_space<vmem>>, vector<128x128xbf16>
    %c3 = arith.constant 3 : index
    %c0_16 = arith.constant 0 : index
    %39 = vector.load %arg4[%c3, %c0_16] : memref<6x128xf32, #tpu.memory_space<vmem>>, vector<1x128xf32>
    %c4 = arith.constant 4 : index
    %c0_17 = arith.constant 0 : index
    %40 = vector.load %arg4[%c4, %c0_17] : memref<6x128xf32, #tpu.memory_space<vmem>>, vector<1x128xf32>
    %c5 = arith.constant 5 : index
    %c0_18 = arith.constant 0 : index
    %41 = vector.load %arg4[%c5, %c0_18] : memref<6x128xf32, #tpu.memory_space<vmem>>, vector<1x128xf32>
    %cst_19 = arith.constant dense<0.000000e+00> : vector<16x128xf32>
    %42 = tpu.matmul %37, %38, %cst_19 {dimension_numbers = #tpu.dot_dimension_numbers<[1], [0], [0], [1], [0, 0, 1, 1], [], []>} : vector<16x128xbf16>, vector<128x128xbf16>, vector<16x128xf32> -> vector<16x128xf32>
    %43 = vector.broadcast %39 : vector<1x128xf32> to vector<16x128xf32>
    %44 = arith.addf %42, %43 : vector<16x128xf32>
    %cst_20 = arith.constant dense<0.000000e+00> : vector<16xf32>
    %45 = vector.multi_reduction <add>, %44, %cst_20 [1] : vector<16x128xf32> to vector<16xf32>
    %46 = vector.shape_cast %45 : vector<16xf32> to vector<16x1xf32>
    %cst_21 = arith.constant 3.125000e-02 : f32
    %47 = vector.broadcast %cst_21 : f32 to vector<16x1xf32>
    %48 = arith.mulf %46, %47 : vector<16x1xf32>
    %49 = vector.broadcast %48 : vector<16x1xf32> to vector<16x128xf32>
    %50 = arith.subf %44, %49 : vector<16x128xf32>
    %51 = arith.mulf %50, %50 : vector<16x128xf32>
    %cst_22 = arith.constant dense<0.000000e+00> : vector<16xf32>
    %52 = vector.multi_reduction <add>, %51, %cst_22 [1] : vector<16x128xf32> to vector<16xf32>
    %53 = vector.shape_cast %52 : vector<16xf32> to vector<16x1xf32>
    %54 = arith.mulf %48, %48 : vector<16x1xf32>
    %cst_23 = arith.constant 9.600000e+01 : f32
    %55 = vector.broadcast %cst_23 : f32 to vector<16x1xf32>
    %56 = arith.mulf %55, %54 : vector<16x1xf32>
    %57 = arith.subf %53, %56 : vector<16x1xf32>
    %cst_24 = arith.constant 3.125000e-02 : f32
    %58 = vector.broadcast %cst_24 : f32 to vector<16x1xf32>
    %59 = arith.mulf %57, %58 : vector<16x1xf32>
    %cst_25 = arith.constant 9.99999974E-6 : f32
    %60 = vector.broadcast %cst_25 : f32 to vector<16x1xf32>
    %61 = arith.addf %59, %60 : vector<16x1xf32>
    %62 = math.rsqrt %61 : vector<16x1xf32>
    %63 = vector.broadcast %62 : vector<16x1xf32> to vector<16x128xf32>
    %64 = arith.mulf %50, %63 : vector<16x128xf32>
    %65 = arith.truncf %64 : vector<16x128xf32> to vector<16x128xbf16>
    %66 = arith.truncf %40 : vector<1x128xf32> to vector<1x128xbf16>
    %67 = vector.broadcast %66 : vector<1x128xbf16> to vector<16x128xbf16>
    %68 = arith.mulf %65, %67 : vector<16x128xbf16>
    %69 = arith.truncf %41 : vector<1x128xf32> to vector<1x128xbf16>
    %70 = vector.broadcast %69 : vector<1x128xbf16> to vector<16x128xbf16>
    %71 = arith.addf %68, %70 : vector<16x128xbf16>
    %cst_26 = arith.constant 0.000000e+00 : bf16
    %72 = vector.broadcast %cst_26 : bf16 to vector<16x128xbf16>
    %73 = arith.maximumf %71, %72 : vector<16x128xbf16>
    %c0_27 = arith.constant 0 : index
    %c0_28 = arith.constant 0 : index
    %74 = vector.load %arg5[%c0_27, %c0_28] : memref<128x32xbf16, #tpu.memory_space<vmem>>, vector<128x32xbf16>
    %cst_29 = arith.constant dense<0.000000e+00> : vector<16x32xf32>
    %75 = tpu.matmul %73, %74, %cst_29 {dimension_numbers = #tpu.dot_dimension_numbers<[1], [0], [0], [1], [0, 0, 1, 1], [], []>} : vector<16x128xbf16>, vector<128x32xbf16>, vector<16x32xf32> -> vector<16x32xf32>
    %c0_30 = arith.constant 0 : index
    %c0_31 = arith.constant 0 : index
    %76 = vector.load %arg6[%c0_30, %c0_31] : memref<1x32xf32, #tpu.memory_space<vmem>>, vector<1x32xf32>
    %77 = vector.broadcast %76 : vector<1x32xf32> to vector<16x32xf32>
    %78 = arith.addf %75, %77 : vector<16x32xf32>
    %c0_32 = arith.constant 0 : index
    %c0_33 = arith.constant 0 : index
    %79 = vector.load %arg7[%c0_32, %c0_33] : memref<16x32xf32, #tpu.memory_space<vmem>>, vector<16x32xf32>
    tpu.vector_store %arg7[%c0_32, %c0_33], %78 {strides = array<i32>} : memref<16x32xf32, #tpu.memory_space<vmem>>, vector<16x32xf32>,
    return
  }
  func.func @transform_0(%arg0: i32) -> (i32, i32) {
    %c0_i32 = arith.constant 0 : i32
    %c0_i32_0 = arith.constant 0 : i32
    return %arg0, %c0_i32 : i32, i32
  }
  func.func @transform_1(%arg0: i32) -> (i32, i32) {
    %c0_i32 = arith.constant 0 : i32
    %c0_i32_0 = arith.constant 0 : i32
    %c0_i32_1 = arith.constant 0 : i32
    return %c0_i32, %c0_i32_0 : i32, i32
  }
  func.func @transform_2(%arg0: i32) -> (i32, i32) {
    %c0_i32 = arith.constant 0 : i32
    %c0_i32_0 = arith.constant 0 : i32
    %c0_i32_1 = arith.constant 0 : i32
    return %c0_i32, %c0_i32_0 : i32, i32
  }
  func.func @transform_3(%arg0: i32) -> (i32, i32) {
    %c0_i32 = arith.constant 0 : i32
    %c0_i32_0 = arith.constant 0 : i32
    %c0_i32_1 = arith.constant 0 : i32
    return %c0_i32, %c0_i32_0 : i32, i32
  }
  func.func @transform_4(%arg0: i32) -> (i32, i32) {
    %c0_i32 = arith.constant 0 : i32
    %c0_i32_0 = arith.constant 0 : i32
    %c0_i32_1 = arith.constant 0 : i32
    return %c0_i32, %c0_i32_0 : i32, i32
  }
  func.func @transform_5(%arg0: i32) -> (i32, i32) {
    %c0_i32 = arith.constant 0 : i32
    %c0_i32_0 = arith.constant 0 : i32
    %c0_i32_1 = arith.constant 0 : i32
    return %c0_i32, %c0_i32_0 : i32, i32
  }
  func.func @transform_6(%arg0: i32) -> (i32, i32) {
    %c0_i32 = arith.constant 0 : i32
    %c0_i32_0 = arith.constant 0 : i32
    return %arg0, %c0_i32 : i32, i32
  }
}

</mosaic_0001>

<llo_original>
// kernel: dense_categorical_decoder_forward.1
$region0: #{dense_categorical_decoder_forward.1}
  #allocation0 [shape = 'u32[]', space=smem, size = 0x4, offset = 0x4, fixed_abs, tag = 'smem constant byte address 0x4 - core index']
  #allocation1 [shape = 'u32[144,128]{1,0:T(1,128)}', space=vmem, size = 0x12000, scoped, tag = 'internal scratch']
  %s0 = inlined_call_operand.vmem [shape: f32[16,32], index: 0, kind: input, shape index: {}]
  %s1 = inlined_call_operand.vmem [shape: bf16[32,128], index: 1, kind: input, shape index: {}]
  %s2 = inlined_call_operand.vmem [shape: bf16[128,128], index: 2, kind: input, shape index: {}]
  %s3 = inlined_call_operand.vmem [shape: f32[6,128], index: 3, kind: input, shape index: {}]
  %s4 = inlined_call_operand.vmem [shape: bf16[128,32], index: 4, kind: input, shape index: {}]
  %s5 = inlined_call_operand.vmem [shape: f32[1,32], index: 5, kind: input, shape index: {}]
  %s6 = inlined_call_operand.vmem [shape: f32[16,32], index: 6, kind: output, shape index: {}]
  %s7 = sld [smem:[#allocation0]]
  $region34: #{dense_categorical_decoder_forward.1} parent=0
    _
  %s9 = ssub.s32 1, %s7
  %s10 = scalar_select 0, %s9, %s7
  // Predicated region
  $region2: #{dense_categorical_decoder_forward.1} parent=0 // pred_check
    _
  $region3: #{dense_categorical_decoder_forward.1} parent=0 // pred_check_branch
    %12 = sbr.rel (0) target = $region5
  $region4: #{dense_categorical_decoder_forward.1} parent=0 // pred_region
    _
  $region5: #{dense_categorical_decoder_forward.1} parent=0 // pred_fallthru
    _
  // Predicated region
  $region6: #{dense_categorical_decoder_forward.1} parent=0 // pred_check
    _
  $region7: #{dense_categorical_decoder_forward.1} parent=0 // pred_check_branch
    %14 = sbr.rel (0) target = $region9
  $region8: #{dense_categorical_decoder_forward.1} parent=0 // pred_region
    _
  $region9: #{dense_categorical_decoder_forward.1} parent=0 // pred_fallthru
    _
  // Predicated region
  $region10: #{dense_categorical_decoder_forward.1} parent=0 // pred_check
    _
  $region11: #{dense_categorical_decoder_forward.1} parent=0 // pred_check_branch
    %16 = sbr.rel (0) target = $region13
  $region12: #{dense_categorical_decoder_forward.1} parent=0 // pred_region
    _
  $region13: #{dense_categorical_decoder_forward.1} parent=0 // pred_fallthru
    _
  // Predicated region
  $region14: #{dense_categorical_decoder_forward.1} parent=0 // pred_check
    _
  $region15: #{dense_categorical_decoder_forward.1} parent=0 // pred_check_branch
    %18 = sbr.rel (0) target = $region17
  $region16: #{dense_categorical_decoder_forward.1} parent=0 // pred_region
    _
  $region17: #{dense_categorical_decoder_forward.1} parent=0 // pred_fallthru
    _
  // Predicated region
  $region18: #{dense_categorical_decoder_forward.1} parent=0 // pred_check
    _
  $region19: #{dense_categorical_decoder_forward.1} parent=0 // pred_check_branch
    %20 = sbr.rel (0) target = $region21
  $region20: #{dense_categorical_decoder_forward.1} parent=0 // pred_region
    _
  $region21: #{dense_categorical_decoder_forward.1} parent=0 // pred_fallthru
    _
  // Predicated region
  $region22: #{dense_categorical_decoder_forward.1} parent=0 // pred_check
    _
  $region23: #{dense_categorical_decoder_forward.1} parent=0 // pred_check_branch
    %22 = sbr.rel (0) target = $region25
  $region24: #{dense_categorical_decoder_forward.1} parent=0 // pred_region
    _
  $region25: #{dense_categorical_decoder_forward.1} parent=0 // pred_fallthru
    _
  %v24 = vld [vmem:[%s0] sm:$0xff]
  %v25 = vld [vmem:[%s0 + $0x8] sm:$0xff]
  %v26 = vld [vmem:[%s1] sm:$0xf]
  %v27 = vld [vmem:[%s1 + $0x4] sm:$0xf]
  %v28 = vld [vmem:[%s1 + $0x8] sm:$0xf]
  %v29 = vld [vmem:[%s1 + $0xc] sm:$0xf]
  %v30 = vld [vmem:[%s3] sm:$0x1]
  %v31 = vld [vmem:[%s3 + $0x1] sm:$0x1]
  %v32 = vld [vmem:[%s3 + $0x2] sm:$0x1]
  %v33 = vpack.c.bf16 %v25, %v24
  %v34 = vlaneseq
  %v35 = vshrl.u32 %v34, 7
  %v36 = vsub.s32 0, %v35
  %v37 = vrot.slane %v30, %v36
  %v42 = vunpack.c.l.b16 %v26
  %v43 = vunpack.c.l.b16 %v27
  %v44 = vunpack.c.l.b16 %v28
  %v45 = vunpack.c.l.b16 %v29
  %v46 = vpack.c.b16 %v43, %v42
  %v47 = vpack.c.b16 %v45, %v44
  %vm50 = vcmask 261120
  %v52 = vsel %vm50, %v33, 0
  %54 = vmatprep.subr.bf16.mxu0 0
  %55 = vmatpush1.bf16.msra.mxu0 %v46
  %56 = vmatprep.subr.bf16.mxu0 0
  %57 = vmatpush1.bf16.msra.mxu0 %v47
  %58 = vmatprep.subr.bf16.mxu0 0
  %59 = vmatpush1.bf16.msra.mxu0 0
  %60 = vmatprep.subr.bf16.mxu0 0
  %61 = vmatpush1.bf16.msra.mxu0 0
  %62 = vmatprep.subr.bf16.mxu0 0
  %63 = vmatpush1.bf16.msra.mxu0 0
  %64 = vmatprep.subr.bf16.mxu0 0
  %65 = vmatpush1.bf16.msra.mxu0 0
  %66 = vmatprep.subr.bf16.mxu0 0
  %67 = vmatpush1.bf16.msra.mxu0 0
  %68 = vmatprep.subr.bf16.mxu0 0
  %69 = vmatpush1.bf16.msra.mxu0 0
  %70 = vmatprep.subr.bf16.mxu0 0
  %71 = vmatpush1.bf16.msra.mxu0 0
  %72 = vmatprep.subr.bf16.mxu0 0
  %73 = vmatpush1.bf16.msra.mxu0 0
  %74 = vmatprep.subr.bf16.mxu0 0
  %75 = vmatpush1.bf16.msra.mxu0 0
  %76 = vmatprep.subr.bf16.mxu0 0
  %77 = vmatpush1.bf16.msra.mxu0 0
  %78 = vmatprep.subr.bf16.mxu0 0
  %79 = vmatpush1.bf16.msra.mxu0 0
  %80 = vmatprep.subr.bf16.mxu0 0
  %81 = vmatpush1.bf16.msra.mxu0 0
  %82 = vmatprep.subr.bf16.mxu0 0
  %83 = vmatpush1.bf16.msra.mxu0 0
  %84 = vmatprep.subr.bf16.mxu0 0
  %85 = vmatpush1.bf16.msra.mxu0 0
  %86 = vmatprep.mubr.bf16.mxu0 0
  %87 = vmatmul.mubr.bf16.gmra.mrb[0].mxu0 %v52
  %v88 = vpop.f32.mrb[0].mxu0
  %v89 = vadd.f32 %v37, %v88
  %v90 = vpop.f32.mrb[0].mxu0
  %v91 = vpop.f32.mrb[0].mxu0
  %v92 = vadd.f32 %v37, %v91
  %v93 = vpop.f32.mrb[0].mxu0
  %94 = vdwg.mxu0
  %95 = vadd.xlane.f32.xlu0 %v89
  %v96 = vpop.xlane.xlu0 %95
  %97 = vadd.xlane.f32.xlu0 %v92
  %v98 = vpop.xlane.xlu0 %97
  %v99 = vmul.f32 %v96, 0.03125
  %v100 = vmul.f32 %v98, 0.03125
  %v101 = vsub.f32 %v89, %v99
  %v102 = vsub.f32 %v92, %v100
  %v103 = vmul.f32 %v101, %v101
  %v104 = vmul.f32 %v102, %v102
  %105 = vadd.xlane.f32.xlu0 %v103
  %v106 = vpop.xlane.xlu0 %105
  %107 = vadd.xlane.f32.xlu0 %v104
  %v108 = vpop.xlane.xlu0 %107
  %v109 = vmul.f32 %v99, %v99
  %v110 = vmul.f32 %v100, %v100
  %v111 = vmul.f32 %v109, 96.0
  %v112 = vmul.f32 %v110, 96.0
  %v113 = vsub.f32 %v106, %v111
  %v114 = vsub.f32 %v108, %v112
  %v115 = vmul.f32 %v113, 0.03125
  %v116 = vmul.f32 %v114, 0.03125
  %v117 = vadd.f32 %v115, 1e-05
  %v118 = vadd.f32 %v116, 1e-05
  %v119 = vrsqrt.pop %v117
  %v120 = vrsqrt.pop %v118
  %v121 = vmul.f32 %v101, %v119
  %v122 = vmul.f32 %v102, %v120
  %v123 = vpack.c.bf16 %v122, %v121
  %v124 = vpack.c.bf16 %v31, %v31
  %v126 = vpack.i.b16 %v124, %v124
  %v128 = vlaneseq
  %v129 = vshrl.u32 %v128, 7
  %v130 = vsub.s32 0, %v129
  %v131 = vrot.slane %v126, %v130
  %v132 = vmul.bf16 %v123, %v131
  %v133 = vpack.c.bf16 %v32, %v32
  %v135 = vpack.i.b16 %v133, %v133
  %v137 = vlaneseq
  %v138 = vshrl.u32 %v137, 7
  %v139 = vsub.s32 0, %v138
  %v140 = vrot.slane %v135, %v139
  %v141 = vadd.bf16 %v132, %v140
  %v142 = vmax.bf16 %v141, 0
  %v143 = vld [vmem:[%s2] sm:$0xf]
  %v144 = vld [vmem:[%s2 + $0x4] sm:$0xf]
  %v145 = vld [vmem:[%s2 + $0x8] sm:$0xf]
  %v146 = vld [vmem:[%s2 + $0xc] sm:$0xf]
  %v147 = vld [vmem:[%s2 + $0x10] sm:$0xf]
  %v148 = vld [vmem:[%s2 + $0x14] sm:$0xf]
  %v149 = vld [vmem:[%s2 + $0x18] sm:$0xf]
  %v150 = vld [vmem:[%s2 + $0x1c] sm:$0xf]
  %v151 = vld [vmem:[%s2 + $0x20] sm:$0xf]
  %v152 = vld [vmem:[%s2 + $0x24] sm:$0xf]
  %v153 = vld [vmem:[%s2 + $0x28] sm:$0xf]
  %v154 = vld [vmem:[%s2 + $0x2c] sm:$0xf]
  %v155 = vld [vmem:[%s2 + $0x30] sm:$0xf]
  %v156 = vld [vmem:[%s2 + $0x34] sm:$0xf]
  %v157 = vld [vmem:[%s2 + $0x38] sm:$0xf]
  %v158 = vld [vmem:[%s2 + $0x3c] sm:$0xf]
  %v159 = vld [vmem:[%s3 + $0x3] sm:$0x1]
  %v160 = vld [vmem:[%s3 + $0x4] sm:$0x1]
  %v161 = vld [vmem:[%s3 + $0x5] sm:$0x1]
  %v162 = vlaneseq
  %v163 = vshrl.u32 %v162, 7
  %v164 = vsub.s32 0, %v163
  %v165 = vrot.slane %v159, %v164
  %v182 = vunpack.c.l.b16 %v143
  %v183 = vunpack.c.l.b16 %v144
  %v184 = vunpack.c.l.b16 %v145
  %v185 = vunpack.c.l.b16 %v146
  %v186 = vunpack.c.l.b16 %v147
  %v187 = vunpack.c.l.b16 %v148
  %v188 = vunpack.c.l.b16 %v149
  %v189 = vunpack.c.l.b16 %v150
  %v190 = vunpack.c.l.b16 %v151
  %v191 = vunpack.c.l.b16 %v152
  %v192 = vunpack.c.l.b16 %v153
  %v193 = vunpack.c.l.b16 %v154
  %v194 = vunpack.c.l.b16 %v155
  %v195 = vunpack.c.l.b16 %v156
  %v196 = vunpack.c.l.b16 %v157
  %v197 = vunpack.c.l.b16 %v158
  %v198 = vpack.c.b16 %v183, %v182
  %v199 = vpack.c.b16 %v185, %v184
  %v200 = vpack.c.b16 %v187, %v186
  %v201 = vpack.c.b16 %v189, %v188
  %v202 = vpack.c.b16 %v191, %v190
  %v203 = vpack.c.b16 %v193, %v192
  %v204 = vpack.c.b16 %v195, %v194
  %v205 = vpack.c.b16 %v197, %v196
  %214 = vmatprep.subr.bf16.mxu0 0
  %215 = vmatpush1.bf16.msra.mxu0 %v198
  %216 = vmatprep.subr.bf16.mxu0 0
  %217 = vmatpush1.bf16.msra.mxu0 %v199
  %218 = vmatprep.subr.bf16.mxu0 0
  %219 = vmatpush1.bf16.msra.mxu0 %v200
  %220 = vmatprep.subr.bf16.mxu0 0
  %221 = vmatpush1.bf16.msra.mxu0 %v201
  %222 = vmatprep.subr.bf16.mxu0 0
  %223 = vmatpush1.bf16.msra.mxu0 %v202
  %224 = vmatprep.subr.bf16.mxu0 0
  %225 = vmatpush1.bf16.msra.mxu0 %v203
  %226 = vmatprep.subr.bf16.mxu0 0
  %227 = vmatpush1.bf16.msra.mxu0 %v204
  %228 = vmatprep.subr.bf16.mxu0 0
  %229 = vmatpush1.bf16.msra.mxu0 %v205
  %230 = vmatprep.subr.bf16.mxu0 0
  %231 = vmatpush1.bf16.msra.mxu0 0
  %232 = vmatprep.subr.bf16.mxu0 0
  %233 = vmatpush1.bf16.msra.mxu0 0
  %234 = vmatprep.subr.bf16.mxu0 0
  %235 = vmatpush1.bf16.msra.mxu0 0
  %236 = vmatprep.subr.bf16.mxu0 0
  %237 = vmatpush1.bf16.msra.mxu0 0
  %238 = vmatprep.subr.bf16.mxu0 0
  %239 = vmatpush1.bf16.msra.mxu0 0
  %240 = vmatprep.subr.bf16.mxu0 0
  %241 = vmatpush1.bf16.msra.mxu0 0
  %242 = vmatprep.subr.bf16.mxu0 0
  %243 = vmatpush1.bf16.msra.mxu0 0
  %244 = vmatprep.subr.bf16.mxu0 0
  %245 = vmatpush1.bf16.msra.mxu0 0
  %246 = vmatprep.mubr.bf16.mxu0 0
  %247 = vmatmul.mubr.bf16.gmra.mrb[0].mxu0 %v142
  %v248 = vpop.f32.mrb[0].mxu0
  %v249 = vadd.f32 %v165, %v248
  %v250 = vpop.f32.mrb[0].mxu0
  %v251 = vpop.f32.mrb[0].mxu0
  %v252 = vadd.f32 %v165, %v251
  %v253 = vpop.f32.mrb[0].mxu0
  %254 = vdwg.mxu0
  %255 = vadd.xlane.f32.xlu0 %v249
  %v256 = vpop.xlane.xlu0 %255
  %257 = vadd.xlane.f32.xlu0 %v252
  %v258 = vpop.xlane.xlu0 %257
  %v259 = vmul.f32 %v256, 0.03125
  %v260 = vmul.f32 %v258, 0.03125
  %v261 = vsub.f32 %v249, %v259
  %v262 = vsub.f32 %v252, %v260
  %v263 = vmul.f32 %v261, %v261
  %v264 = vmul.f32 %v262, %v262
  %265 = vadd.xlane.f32.xlu0 %v263
  %v266 = vpop.xlane.xlu0 %265
  %267 = vadd.xlane.f32.xlu0 %v264
  %v268 = vpop.xlane.xlu0 %267
  %v269 = vmul.f32 %v259, %v259
  %v270 = vmul.f32 %v260, %v260
  %v271 = vmul.f32 %v269, 96.0
  %v272 = vmul.f32 %v270, 96.0
  %v273 = vsub.f32 %v266, %v271
  %v274 = vsub.f32 %v268, %v272
  %v275 = vmul.f32 %v273, 0.03125
  %v276 = vmul.f32 %v274, 0.03125
  %v277 = vadd.f32 %v275, 1e-05
  %v278 = vadd.f32 %v276, 1e-05
  %v279 = vrsqrt.pop %v277
  %v280 = vrsqrt.pop %v278
  %v281 = vmul.f32 %v261, %v279
  %v282 = vmul.f32 %v262, %v280
  %v283 = vpack.c.bf16 %v282, %v281
  %v284 = vpack.c.bf16 %v160, %v160
  %v286 = vpack.i.b16 %v284, %v284
  %v288 = vlaneseq
  %v289 = vshrl.u32 %v288, 7
  %v290 = vsub.s32 0, %v289
  %v291 = vrot.slane %v286, %v290
  %v292 = vmul.bf16 %v283, %v291
  %v293 = vpack.c.bf16 %v161, %v161
  %v295 = vpack.i.b16 %v293, %v293
  %v297 = vlaneseq
  %v298 = vshrl.u32 %v297, 7
  %v299 = vsub.s32 0, %v298
  %v300 = vrot.slane %v295, %v299
  %v301 = vadd.bf16 %v292, %v300
  %v302 = vmax.bf16 %v301, 0
  %v303 = vld [vmem:[%s4] sm:$0xf]
  %v304 = vld [vmem:[%s4 + $0x4] sm:$0xf]
  %v305 = vld [vmem:[%s4 + $0x8] sm:$0xf]
  %v306 = vld [vmem:[%s4 + $0xc] sm:$0xf]
  %v307 = vld [vmem:[%s4 + $0x10] sm:$0xf]
  %v308 = vld [vmem:[%s4 + $0x14] sm:$0xf]
  %v309 = vld [vmem:[%s4 + $0x18] sm:$0xf]
  %v310 = vld [vmem:[%s4 + $0x1c] sm:$0xf]
  %v311 = vld [vmem:[%s4 + $0x20] sm:$0xf]
  %v312 = vld [vmem:[%s4 + $0x24] sm:$0xf]
  %v313 = vld [vmem:[%s4 + $0x28] sm:$0xf]
  %v314 = vld [vmem:[%s4 + $0x2c] sm:$0xf]
  %v315 = vld [vmem:[%s4 + $0x30] sm:$0xf]
  %v316 = vld [vmem:[%s4 + $0x34] sm:$0xf]
  %v317 = vld [vmem:[%s4 + $0x38] sm:$0xf]
  %v318 = vld [vmem:[%s4 + $0x3c] sm:$0xf]
  %v319 = vld [vmem:[%s5] sm:$0x1]
  %v321 = vlaneseq
  %v322 = vshrl.u32 %v321, 7
  %v323 = vsub.s32 0, %v322
  %v324 = vrot.slane %v319, %v323
  %v342 = vunpack.c.l.b16 %v303
  %v343 = vunpack.c.l.b16 %v304
  %v344 = vunpack.c.l.b16 %v305
  %v345 = vunpack.c.l.b16 %v306
  %v346 = vunpack.c.l.b16 %v307
  %v347 = vunpack.c.l.b16 %v308
  %v348 = vunpack.c.l.b16 %v309
  %v349 = vunpack.c.l.b16 %v310
  %v350 = vunpack.c.l.b16 %v311
  %v351 = vunpack.c.l.b16 %v312
  %v352 = vunpack.c.l.b16 %v313
  %v353 = vunpack.c.l.b16 %v314
  %v354 = vunpack.c.l.b16 %v315
  %v355 = vunpack.c.l.b16 %v316
  %v356 = vunpack.c.l.b16 %v317
  %v357 = vunpack.c.l.b16 %v318
  %v358 = vpack.c.b16 %v343, %v342
  %v359 = vpack.c.b16 %v345, %v344
  %v360 = vpack.c.b16 %v347, %v346
  %v361 = vpack.c.b16 %v349, %v348
  %v362 = vpack.c.b16 %v351, %v350
  %v363 = vpack.c.b16 %v353, %v352
  %v364 = vpack.c.b16 %v355, %v354
  %v365 = vpack.c.b16 %v357, %v356
  %374 = vmatprep.subr.bf16.mxu0 0
  %375 = vmatpush1.bf16.msra.mxu0 %v358
  %376 = vmatprep.subr.bf16.mxu0 0
  %377 = vmatpush1.bf16.msra.mxu0 %v359
  %378 = vmatprep.subr.bf16.mxu0 0
  %379 = vmatpush1.bf16.msra.mxu0 %v360
  %380 = vmatprep.subr.bf16.mxu0 0
  %381 = vmatpush1.bf16.msra.mxu0 %v361
  %382 = vmatprep.subr.bf16.mxu0 0
  %383 = vmatpush1.bf16.msra.mxu0 %v362
  %384 = vmatprep.subr.bf16.mxu0 0
  %385 = vmatpush1.bf16.msra.mxu0 %v363
  %386 = vmatprep.subr.bf16.mxu0 0
  %387 = vmatpush1.bf16.msra.mxu0 %v364
  %388 = vmatprep.subr.bf16.mxu0 0
  %389 = vmatpush1.bf16.msra.mxu0 %v365
  %390 = vmatprep.subr.bf16.mxu0 0
  %391 = vmatpush1.bf16.msra.mxu0 0
  %392 = vmatprep.subr.bf16.mxu0 0
  %393 = vmatpush1.bf16.msra.mxu0 0
  %394 = vmatprep.subr.bf16.mxu0 0
  %395 = vmatpush1.bf16.msra.mxu0 0
  %396 = vmatprep.subr.bf16.mxu0 0
  %397 = vmatpush1.bf16.msra.mxu0 0
  %398 = vmatprep.subr.bf16.mxu0 0
  %399 = vmatpush1.bf16.msra.mxu0 0
  %400 = vmatprep.subr.bf16.mxu0 0
  %401 = vmatpush1.bf16.msra.mxu0 0
  %402 = vmatprep.subr.bf16.mxu0 0
  %403 = vmatpush1.bf16.msra.mxu0 0
  %404 = vmatprep.subr.bf16.mxu0 0
  %405 = vmatpush1.bf16.msra.mxu0 0
  %406 = vmatprep.mubr.bf16.mxu0 0
  %407 = vmatmul.mubr.bf16.gmra.mrb[0].mxu0 %v302
  %v408 = vpop.f32.mrb[0].mxu0
  %v409 = vadd.f32 %v324, %v408
  %v410 = vpop.f32.mrb[0].mxu0
  %v411 = vpop.f32.mrb[0].mxu0
  %v412 = vadd.f32 %v324, %v411
  %v413 = vpop.f32.mrb[0].mxu0
  %414 = vdwg.mxu0
  %415 = vst.msk [vmem:[%s6] sm:$0xff] %vm50, %v409
  %416 = vst.msk [vmem:[%s6 + $0x8] sm:$0xff] %vm50, %v412
  // Predicated region
  $region26: #{dense_categorical_decoder_forward.1} parent=0 // pred_check
    _
  $region27: #{dense_categorical_decoder_forward.1} parent=0 // pred_check_branch
    %418 = sbr.rel (0) target = $region29
  $region28: #{dense_categorical_decoder_forward.1} parent=0 // pred_region
    _
  $region29: #{dense_categorical_decoder_forward.1} parent=0 // pred_fallthru
    _
  // Predicated region
  $region30: #{dense_categorical_decoder_forward.1} parent=0 // pred_check
    _
  $region31: #{dense_categorical_decoder_forward.1} parent=0 // pred_check_branch
    %420 = sbr.rel (0) target = $region33
  $region32: #{dense_categorical_decoder_forward.1} parent=0 // pred_region
    _
  $region33: #{dense_categorical_decoder_forward.1} parent=0 // pred_fallthru
    _

</llo_original>
